<compile_context>
chip_gen: v6e
topology: v6e:2x2x1
jax: 0.10.0
libtpu: 0.0.40
codegen_flags: <defaults>
</compile_context>

<pallas_src>
import functools
from typing import Tuple, Union

import jax
import jax.numpy as jnp
from jax.experimental import pallas as pl
from jax.experimental.pallas import tpu as pltpu

IntOrPair = Union[int, Tuple[int, int]]


def force_pair(v: IntOrPair) -> Tuple[int, int]:
    if isinstance(v, tuple):
        if len(v) != 2:
            raise ValueError(v)
        return (int(v[0]), int(v[1]))
    elif isinstance(v, int):
        return (v, v)
    raise ValueError(v)


def _round_up(x: int, m: int) -> int:
    return ((x + m - 1) // m) * m


# Fixed tile candidates (all (8,128)/(16,128)-friendly); an exact-fit candidate
# is added per problem so tiny layers don't over-pad.
_TILE_CANDIDATES = (1024, 768, 512, 384, 256, 128)


def _pick_tile(dim: int, exact_fit: int, *, prefer_two_blocks: bool = False) -> int:
    """Pick a tile size minimizing pad waste.

    Tie-breaks: prefer >=2 blocks (so a 'parallel' axis can feed both v7x
    TensorCores) when requested, then prefer the larger tile (fewer grid steps,
    deeper reuse).
    """
    cands = set(_TILE_CANDIDATES)
    if 0 < exact_fit <= 1024:
        cands.add(exact_fit)
    best_t, best_key = None, None
    for t in sorted(cands):
        padded = _round_up(dim, t)
        nblk = padded // t
        key = (padded, 1 if (prefer_two_blocks and nblk < 2) else 0, -t)
        if best_key is None or key < best_key:
            best_key, best_t = key, t
    return best_t


# ---------------------------------------------------------------------------
# Pallas kernel: tiled GEMM, K-reduction accumulated directly into the
# VMEM-resident f32 output block (MXU hot path).
# ---------------------------------------------------------------------------
def _gemm_kernel(a_ref, b_ref, o_ref):
    # a_ref: (tm, tk) bf16, b_ref: (tk, tn) bf16, o_ref: (tm, tn) f32.
    # o_ref's block index (i, j) is constant across the K grid axis, so it stays
    # resident in VMEM and doubles as the accumulator.
    @pl.when(pl.program_id(2) == 0)
    def _():
        o_ref[...] = jnp.zeros_like(o_ref)

    o_ref[...] += jnp.dot(a_ref[...], b_ref[...],
                          preferred_element_type=jnp.float32)


def _conv_gemm(a: jax.Array, b: jax.Array, *, tm: int, tn: int, tk: int) -> jax.Array:
    """a: (Mp, Kp) bf16, b: (Kp, Np) bf16; all dims exact multiples of the tiles."""
    Mp, Kp = a.shape
    Kp2, Np = b.shape
    assert Kp == Kp2 and Mp % tm == 0 and Np % tn == 0 and Kp % tk == 0
    grid = (Mp // tm, Np // tn, Kp // tk)

    # Double-buffered pipeline footprint (bf16 inputs, f32 output block).
    footprint = 2 * (tm * tk * 2 + tk * tn * 2 + tm * tn * 4)
    vmem_limit = int(min(max(footprint + (8 << 20), 16 << 20), 48 << 20))

    cost = pl.CostEstimate(
        flops=2 * Mp * Np * Kp,
        transcendentals=0,
        # A is streamed once per N-tile; B and the f32 output once.
        bytes_accessed=Mp * Kp * 2 * (Np // tn) + Kp * Np * 2 + Mp * Np * 4,
    )

    return pl.pallas_call(
        _gemm_kernel,
        out_shape=jax.ShapeDtypeStruct((Mp, Np), jnp.float32),
        grid_spec=pltpu.PrefetchScalarGridSpec(
            num_scalar_prefetch=0,
            grid=grid,
            in_specs=[
                pl.BlockSpec((tm, tk), lambda i, j, k: (i, k)),
                pl.BlockSpec((tk, tn), lambda i, j, k: (k, j)),
            ],
            out_specs=pl.BlockSpec((tm, tn), lambda i, j, k: (i, j)),
        ),
        compiler_params=pltpu.CompilerParams(
            dimension_semantics=("parallel", "parallel", "arbitrary"),
            vmem_limit_bytes=vmem_limit,
        ),
        cost_estimate=cost,
    )(a, b)


# ---------------------------------------------------------------------------
# Conv2d forward (matches the PyTorch module's bias-free semantics).
# ---------------------------------------------------------------------------
@functools.partial(jax.jit, static_argnums=(2, 3, 4, 5))
def conv2d_forward(x, weight, sh, sw, padh, padw):
    """x: (B, IC, H, W) f32, weight: (OC, IC, KH, KW) f32 -> (B, OC, OH, OW) f32."""
    B, IC, H, W = x.shape
    OC, _, KH, KW = weight.shape

    # NHWC internally: one cheap transpose in / out instead of transposing the
    # KH*KW-inflated patch tensor.
    # TODO(synk): keep NHWC end-to-end in a real model to drop both transposes.
    x_nhwc = jnp.transpose(x, (0, 2, 3, 1))
    # Cast to bf16 BEFORE building patches so the MxK intermediate is only ever
    # materialized once, in bf16 (f32 accumulation happens inside the kernel).
    x_pad = jnp.pad(
        x_nhwc, ((0, 0), (padh, padh), (padw, padw), (0, 0))
    ).astype(jnp.bfloat16)
    Hp, Wp = H + 2 * padh, W + 2 * padw
    OH = (Hp - KH) // sh + 1
    OW = (Wp - KW) // sw + 1

    M = B * OH * OW
    K = IC * KH * KW
    N = OC

    # Tile selection: minimize pad waste; tn covers all of OC when it fits so the
    # big patches operand streams from HBM exactly once; tm is a multiple of 16
    # (bf16 min sublane tile) and prefers >=2 blocks for the v7x megacore.
    tm = _pick_tile(M, _round_up(M, 16), prefer_two_blocks=True)
    tk = _pick_tile(K, _round_up(K, 128))
    tn = _pick_tile(N, _round_up(N, 128))
    Mp, Kp, Np = _round_up(M, tm), _round_up(K, tk), _round_up(N, tn)

    # TODO(synk): fuse im2col into the kernel DMA (stream padded NHWC tiles from
    # HBM and loop over the KH*KW taps in-kernel) to remove this KH*KW-fold
    # patch materialization entirely.
    cols = []
    for i in range(KH):
        for j in range(KW):
            cols.append(x_pad[:, i:i + sh * OH:sh, j:j + sw * OW:sw, :])
    # (B, OH, OW, IC, KH*KW) -> (M, K); K-order = ic*KH*KW + kh*KW + kw, which
    # matches weight.reshape(OC, K) exactly -> no transpose of the patch tensor.
    patches = jnp.stack(cols, axis=-1).reshape(M, K)
    a = jnp.pad(patches, ((0, Mp - M), (0, Kp - K)))            # already bf16
    b = jnp.pad(weight.reshape(OC, K).T.astype(jnp.bfloat16),
                ((0, Kp - K), (0, Np - N)))

    out = _conv_gemm(a, b, tm=tm, tn=tn, tk=tk)                 # (Mp, Np) f32

    out = out[:M, :N].reshape(B, OH, OW, OC)
    return jnp.transpose(out, (0, 3, 1, 2)).astype(x.dtype)


class Conv2d:
    """Same forward semantics as the PyTorch module (bias defined but unused)."""

    def __init__(self, in_channels: int, out_channels: int,
                 kernel_size: IntOrPair, stride: IntOrPair = 1,
                 padding: IntOrPair = 0, *, key=None):
        self.kh, self.kw = force_pair(kernel_size)
        self.padh, self.padw = force_pair(padding)
        self.sh, self.sw = force_pair(stride)
        self.in_channels = in_channels
        self.out_channels = out_channels

        sf = (1.0 / (in_channels * self.kh * self.kw)) ** 0.5
        if key is None:
            key = jax.random.PRNGKey(0)
        kw_, kb_ = jax.random.split(key)
        self.weight = sf * (
            2.0 * jax.random.uniform(
                kw_, (out_channels, in_channels, self.kh, self.kw),
                dtype=jnp.float32) - 1.0
        )
        # Parity with the module; forward() never uses it.
        self.bias = sf * (
            2.0 * jax.random.uniform(kb_, (out_channels,), dtype=jnp.float32)
            - 1.0
        )

    def __call__(self, x: jax.Array) -> jax.Array:
        return conv2d_forward(x, self.weight, self.sh, self.sw,
                              self.padh, self.padw)


if __name__ == "__main__":
    key = jax.random.PRNGKey(0)
    kx, kmod = jax.random.split(key)

    B, IC, H, W = 2, 4, 16, 16
    OC, Ksz = 8, 3
    x = jax.random.normal(kx, (B, IC, H, W), dtype=jnp.float32)

    # Case 1: stride=1, padding=1 (same spatial size).
    conv = Conv2d(IC, OC, kernel_size=Ksz, stride=1, padding=1, key=kmod)
    out = jax.block_until_ready(conv(x))
    ref = jax.lax.conv_general_dilated(
        x, conv.weight, window_strides=(1, 1), padding=((1, 1), (1, 1)),
        dimension_numbers=("NCHW", "OIHW", "NCHW"))
    assert out.shape == (B, OC, H, W), out.shape
    # bf16 MXU operands with f32 accumulation -> bf16-appropriate tolerance.
    assert jnp.allclose(out, ref, atol=3e-2, rtol=3e-2), "mismatch vs reference (s=1)"

    # Case 2: stride=2, padding=0 (exercises the strided / exact-fit-tile path).
    conv2 = Conv2d(IC, OC, kernel_size=Ksz, stride=2, padding=0, key=kmod)
    out2 = jax.block_until_ready(conv2(x))
    ref2 = jax.lax.conv_general_dilated(
        x, conv2.weight, window_strides=(2, 2), padding=((0, 0), (0, 0)),
        dimension_numbers=("NCHW", "OIHW", "NCHW"))
    assert out2.shape == ref2.shape, (out2.shape, ref2.shape)
    assert jnp.allclose(out2, ref2, atol=3e-2, rtol=3e-2), "mismatch vs reference (s=2)"

    print("KERNEL_OK")
</pallas_src>

<mosaic_0001>
module attributes {stable_mosaic.version = 11 : i64} {
  func.func @_gemm_kernel(%arg0: i32, %arg1: i32, %arg2: i32, %arg3: memref<256x128xbf16, #tpu.memory_space<vmem>>, %arg4: memref<128x128xbf16, #tpu.memory_space<vmem>>, %arg5: memref<256x128xf32, #tpu.memory_space<vmem>>) attributes {dimension_semantics = [#tpu.dimension_semantics<parallel>, #tpu.dimension_semantics<parallel>, #tpu.dimension_semantics<arbitrary>], iteration_bounds = array<i64: 2, 1, 1>, scalar_prefetch = 0 : i64, scratch_operands = 0 : i64, tpu.core_type = #tpu.core_type<tc>, window_params = [{transform_indices = @transform_0, window_bounds = array<i64: 256, 128>}, {transform_indices = @transform_1, window_bounds = array<i64: 128, 128>}, {transform_indices = @transform_2, window_bounds = array<i64: 256, 128>}]} {
    %c0_i32 = arith.constant 0 : i32
    %0 = arith.cmpi eq, %arg2, %c0_i32 : i32
    %1 = arith.extui %0 : i1 to i32
    %c0_i32_0 = arith.constant 0 : i32
    %2 = arith.cmpi ne, %1, %c0_i32_0 : i32
    scf.if %2 {
      %cst_8 = arith.constant 0.000000e+00 : f32
      %9 = vector.broadcast %cst_8 : f32 to vector<256x128xf32>
      %c0_9 = arith.constant 0 : index
      %c0_10 = arith.constant 0 : index
      %10 = vector.load %arg5[%c0_9, %c0_10] : memref<256x128xf32, #tpu.memory_space<vmem>>, vector<256x128xf32>
      tpu.vector_store %arg5[%c0_9, %c0_10], %9 {strides = array<i32>} : memref<256x128xf32, #tpu.memory_space<vmem>>, vector<256x128xf32>,
    } else {
    }
    %c0 = arith.constant 0 : index
    %c0_1 = arith.constant 0 : index
    %3 = vector.load %arg5[%c0, %c0_1] : memref<256x128xf32, #tpu.memory_space<vmem>>, vector<256x128xf32>
    %c0_2 = arith.constant 0 : index
    %c0_3 = arith.constant 0 : index
    %4 = vector.load %arg3[%c0_2, %c0_3] : memref<256x128xbf16, #tpu.memory_space<vmem>>, vector<256x128xbf16>
    %c0_4 = arith.constant 0 : index
    %c0_5 = arith.constant 0 : index
    %5 = vector.load %arg4[%c0_4, %c0_5] : memref<128x128xbf16, #tpu.memory_space<vmem>>, vector<128x128xbf16>
    %cst = arith.constant dense<0.000000e+00> : vector<256x128xf32>
    %6 = tpu.matmul %4, %5, %cst {dimension_numbers = #tpu.dot_dimension_numbers<[1], [0], [0], [1], [0, 0, 1, 1], [], []>} : vector<256x128xbf16>, vector<128x128xbf16>, vector<256x128xf32> -> vector<256x128xf32>
    %7 = arith.addf %3, %6 : vector<256x128xf32>
    %c0_6 = arith.constant 0 : index
    %c0_7 = arith.constant 0 : index
    %8 = vector.load %arg5[%c0_6, %c0_7] : memref<256x128xf32, #tpu.memory_space<vmem>>, vector<256x128xf32>
    tpu.vector_store %arg5[%c0_6, %c0_7], %7 {strides = array<i32>} : memref<256x128xf32, #tpu.memory_space<vmem>>, vector<256x128xf32>,
    return
  }
  func.func @transform_0(%arg0: i32, %arg1: i32, %arg2: i32) -> (i32, i32) {
    %c0_i32 = arith.constant 0 : i32
    return %arg0, %arg2 : i32, i32
  }
  func.func @transform_1(%arg0: i32, %arg1: i32, %arg2: i32) -> (i32, i32) {
    %c0_i32 = arith.constant 0 : i32
    return %arg2, %arg1 : i32, i32
  }
  func.func @transform_2(%arg0: i32, %arg1: i32, %arg2: i32) -> (i32, i32) {
    %c0_i32 = arith.constant 0 : i32
    return %arg0, %arg1 : i32, i32
  }
}

</mosaic_0001>

<llo_original>
// kernel: conv2d_forward.1
$region0: #{conv2d_forward.1}
  #allocation0 [shape = 'u32[]', space=smem, size = 0x4, offset = 0x4, fixed_abs, tag = 'smem constant byte address 0x4 - core index']
  #allocation1 [shape = 'u32[144,128]{1,0:T(1,128)}', space=vmem, size = 0x12000, scoped, tag = 'internal scratch']
  %s0 = inlined_call_operand.vmem [shape: bf16[512,128], index: 0, kind: input, shape index: {}]
  %s1 = inlined_call_operand.vmem [shape: bf16[128,128], index: 1, kind: input, shape index: {}]
  %s2 = inlined_call_operand.vmem [shape: f32[512,128], index: 2, kind: output, shape index: {}]
  %s3 = sld [smem:[#allocation0]]
  $region45: #{conv2d_forward.1} parent=0
    _
  %s5 = ssub.s32 1, %s3
  %s6 = scalar_select 0, %s5, %s3
  loop: start=0, step=1, limit=4
  $region2: #{conv2d_forward.1} parent=0 // loop_pre_header
    _
  $region3: #{conv2d_forward.1} parent=0 // loop_header
    %s8 = sphi 0, %s12
    %p9 = scmp.ge.s32.totalorder %s8, 4
    %s15 = sphi 0, %s34
    %s16 = sphi 0, %s30
    %s17 = sphi 0, %s26
    %s18 = sphi 0, %s15
    %s19 = sphi 0, %s16
    %s20 = sphi 0, %s17
    %s21 = sphi 0, %s18
    %s22 = sphi 0, %s19
    %s23 = sphi 0, %s20
    %s39 = sphi 0, %s41
    %s42 = sphi 0, %s39
    %s43 = sphi 0, %s42
    %s59 = sphi 0, %s43
    %s67 = sphi 0, %s69
    %s70 = sphi 0, %s67
    %s71 = sphi 0, %s70
    %s87 = sphi 0, %s71
    %s95 = sphi 0, %s97
    %s98 = sphi 0, %s95
    %s99 = sphi 0, %s98
    %s115 = sphi 0, %s99
  $region4: #{conv2d_forward.1} parent=0 // loop_header_branch
    %11 = sbr.rel (%p9) target = $region8
  $region5: #{conv2d_forward.1} parent=0 // loop_body
    %s13 = ssub.s32 %s8, 1
    %s14 = ssub.s32 %s8, 2
    %s24 = sadd.s32 1, %s17
    %p25 = scmp.ge.s32.totalorder %s24, 1
    %s26 = scalar_select %p25, 0, %s24
    %s27 = sadd.s32 1, %s16
    %s28 = scalar_select %p25, %s27, %s16
    %p29 = scmp.ge.s32.totalorder %s28, 1
    %s30 = scalar_select %p29, 0, %s28
    %s31 = sadd.s32 1, %s15
    %s32 = scalar_select %p29, %s31, %s15
    %p33 = scmp.ge.s32.totalorder %s32, 2
    %s34 = scalar_select %p33, 0, %s32
    %s35 = ssub.s32 %s15, %s34
    %s36 = ssub.s32 %s17, %s26
    %s37 = sor.u32 %s35, %s36
    %p38 = scmp.eq.s32.totalorder %s37, 0
    %s40 = sadd.s32 %s39, 1
    %s41 = scalar_select %p38, %s39, %s40
    %p44 = pneg %p38
    %p45 = scmp.eq.s32.totalorder %s8, 1
    %p46 = por %p44, %p45
    %p47 = scmp.ne.s32.totalorder %s39, %s42
    %p48 = scmp.eq.s32.totalorder %s8, 0
    %p49 = por %p47, %p48
    %p50 = scmp.ne.s32.totalorder %s39, %s42
    %p51 = scmp.eq.s32.totalorder %s13, 1
    %p52 = por %p50, %p51
    %p53 = scmp.ne.s32.totalorder %s42, %s43
    %p54 = scmp.eq.s32.totalorder %s13, 0
    %p55 = por %p53, %p54
    %p56 = scmp.ne.s32.totalorder %s42, %s43
    %p57 = scmp.eq.s32.totalorder %s14, 1
    %p58 = por %p56, %p57
    %p60 = scmp.ne.s32.totalorder %s43, %s59
    %p61 = scmp.eq.s32.totalorder %s14, 0
    %p62 = por %p60, %p61
    %s63 = ssub.s32 %s17, %s26
    %s64 = ssub.s32 %s16, %s30
    %s65 = sor.u32 %s63, %s64
    %p66 = scmp.eq.s32.totalorder %s65, 0
    %s68 = sadd.s32 %s67, 1
    %s69 = scalar_select %p66, %s67, %s68
    %p72 = pneg %p66
    %p73 = scmp.eq.s32.totalorder %s8, 1
    %p74 = por %p72, %p73
    %p75 = scmp.ne.s32.totalorder %s67, %s70
    %p76 = scmp.eq.s32.totalorder %s8, 0
    %p77 = por %p75, %p76
    %p78 = scmp.ne.s32.totalorder %s67, %s70
    %p79 = scmp.eq.s32.totalorder %s13, 1
    %p80 = por %p78, %p79
    %p81 = scmp.ne.s32.totalorder %s70, %s71
    %p82 = scmp.eq.s32.totalorder %s13, 0
    %p83 = por %p81, %p82
    %p84 = scmp.ne.s32.totalorder %s70, %s71
    %p85 = scmp.eq.s32.totalorder %s14, 1
    %p86 = por %p84, %p85
    %p88 = scmp.ne.s32.totalorder %s71, %s87
    %p89 = scmp.eq.s32.totalorder %s14, 0
    %p90 = por %p88, %p89
    %s91 = ssub.s32 %s15, %s34
    %s92 = ssub.s32 %s16, %s30
    %s93 = sor.u32 %s91, %s92
    %p94 = scmp.eq.s32.totalorder %s93, 0
    %s96 = sadd.s32 %s95, 1
    %s97 = scalar_select %p94, %s95, %s96
    %p100 = pneg %p94
    %p101 = scmp.eq.s32.totalorder %s8, 1
    %p102 = por %p100, %p101
    %p103 = scmp.ne.s32.totalorder %s95, %s98
    %p104 = scmp.eq.s32.totalorder %s8, 0
    %p105 = por %p103, %p104
    %p106 = scmp.ne.s32.totalorder %s95, %s98
    %p107 = scmp.eq.s32.totalorder %s13, 1
    %p108 = por %p106, %p107
    %p109 = scmp.ne.s32.totalorder %s98, %s99
    %p110 = scmp.eq.s32.totalorder %s13, 0
    %p111 = por %p109, %p110
    %p112 = scmp.ne.s32.totalorder %s98, %s99
    %p113 = scmp.eq.s32.totalorder %s14, 1
    %p114 = por %p112, %p113
    %p116 = scmp.ne.s32.totalorder %s99, %s115
    %p117 = scmp.eq.s32.totalorder %s14, 0
    %p118 = por %p116, %p117
    %p119 = scmp.le.s32.totalorder 1, %s8
    %p120 = scmp.lt.s32.totalorder %s8, 3
    %p121 = pnand %p119, %p120
    %p122 = pneg %p121
    // Predicated region
    $region9: #{conv2d_forward.1} parent=5 // pred_check
      _
    $region10: #{conv2d_forward.1} parent=5 // pred_check_branch
      %124 = sbr.rel (%p121) target = $region12
    $region11: #{conv2d_forward.1} parent=5 // pred_region
      %s125 = ssub.s32 %s8, 1
      // Predicated region
      $region13: #{conv2d_forward.1} parent=11 // pred_check
        %p126 = pneg %p83
      $region14: #{conv2d_forward.1} parent=11 // pred_check_branch
        %128 = sbr.rel (%p126) target = $region16
      $region15: #{conv2d_forward.1} parent=11 // pred_region
        %s129 = smul.u32 16, %s20
        %p130 = scmp.lt.s32.totalorder %s129, 15
        %s131 = scalar_select %p130, %s129, 15
        %p132 = scmp.lt.s32.totalorder %s19, 0
        %s133 = scalar_select %p132, %s19, 0
        %s134 = sadd.s32 %s133, %s131
        %s135 = smul.addr %s134, 4
        %s136 = scalar_lea.vmem %s1, %s135
        %s137 = smul.u32 16, %s20
      $region16: #{conv2d_forward.1} parent=11 // pred_fallthru
        _
    $region12: #{conv2d_forward.1} parent=5 // pred_fallthru
      _
    %p138 = scmp.lt.s32.totalorder %s8, 2
    // Predicated region
    $region17: #{conv2d_forward.1} parent=5 // pred_check
      %p139 = pneg %p138
    $region18: #{conv2d_forward.1} parent=5 // pred_check_branch
      %141 = sbr.rel (%p139) target = $region20
    $region19: #{conv2d_forward.1} parent=5 // pred_region
      // Predicated region
      $region21: #{conv2d_forward.1} parent=19 // pred_check
        %p142 = pneg %p49
      $region22: #{conv2d_forward.1} parent=19 // pred_check_branch
        %144 = sbr.rel (%p142) target = $region24
      $region23: #{conv2d_forward.1} parent=19 // pred_region
        %s145 = smul.u32 32, %s15
        %p146 = scmp.lt.s32.totalorder %s145, 63
        %s147 = scalar_select %p146, %s145, 63
        %p148 = scmp.lt.s32.totalorder %s17, 0
        %s149 = scalar_select %p148, %s17, 0
        %s150 = sadd.s32 %s149, %s147
        %s151 = smul.addr %s150, 4
        %s152 = scalar_lea.vmem %s0, %s151
        %s153 = smul.u32 32, %s15
      $region24: #{conv2d_forward.1} parent=19 // pred_fallthru
        _
    $region20: #{conv2d_forward.1} parent=5 // pred_fallthru
      _
    %p154 = scmp.le.s32.totalorder 1, %s8
    %p155 = scmp.lt.s32.totalorder %s8, 3
    %p156 = pnand %p154, %p155
    %p157 = pneg %p156
    // Predicated region
    $region25: #{conv2d_forward.1} parent=5 // pred_check
      _
    $region26: #{conv2d_forward.1} parent=5 // pred_check_branch
      %159 = sbr.rel (%p156) target = $region28
    $region27: #{conv2d_forward.1} parent=5 // pred_region
      %s160 = ssub.s32 %s8, 1
      %s161 = smul.u32 32, %s18
      %p162 = scmp.lt.s32.totalorder %s161, 63
      %s163 = scalar_select %p162, %s161, 63
      %p164 = scmp.lt.s32.totalorder %s20, 0
      %s165 = scalar_select %p164, %s20, 0
      %s166 = sadd.s32 %s165, %s163
      %s167 = smul.addr %s166, 4
      %s168 = scalar_lea.vmem %s0, %s167
      %p169 = pneg %p55
      %p170 = pneg %p52
      %s171 = smul.u32 16, %s20
      %p172 = scmp.lt.s32.totalorder %s171, 15
      %s173 = scalar_select %p172, %s171, 15
      %p174 = scmp.lt.s32.totalorder %s19, 0
      %s175 = scalar_select %p174, %s19, 0
      %s176 = sadd.s32 %s175, %s173
      %s177 = smul.addr %s176, 4
      %s178 = scalar_lea.vmem %s1, %s177
      %p179 = pneg %p83
      %p180 = pneg %p80
      %p181 = pneg %p111
      %p182 = pneg %p108
      %s183 = smul.u32 32, %s18
      %p184 = scmp.lt.s32.totalorder %s183, 63
      %s185 = scalar_select %p184, %s183, 63
      %p186 = scmp.lt.s32.totalorder %s19, 0
      %s187 = scalar_select %p186, %s19, 0
      %s188 = sadd.s32 %s187, %s185
      %s189 = smul.addr %s188, 8
      %s190 = scalar_lea.vmem %s2, %s189
      %s191 = smul.u32 32, %s18
      %p192 = scmp.lt.s32.totalorder %s191, 63
      %s193 = scalar_select %p192, %s191, 63
      %p194 = scmp.lt.s32.totalorder %s20, 0
      %s195 = scalar_select %p194, %s20, 0
      %s196 = sadd.s32 %s195, %s193
      %s197 = smul.addr %s196, 4
      %s198 = scalar_lea.vmem %s0, %s197
      %s199 = smul.u32 32, %s18
      %s200 = smul.u32 16, %s20
      %p201 = scmp.lt.s32.totalorder %s200, 15
      %s202 = scalar_select %p201, %s200, 15
      %p203 = scmp.lt.s32.totalorder %s19, 0
      %s204 = scalar_select %p203, %s19, 0
      %s205 = sadd.s32 %s204, %s202
      %s206 = smul.addr %s205, 4
      %s207 = scalar_lea.vmem %s1, %s206
      %s208 = smul.u32 16, %s20
      %s209 = smul.u32 32, %s18
      %p210 = scmp.lt.s32.totalorder %s209, 63
      %s211 = scalar_select %p210, %s209, 63
      %p212 = scmp.lt.s32.totalorder %s19, 0
      %s213 = scalar_select %p212, %s19, 0
      %s214 = sadd.s32 %s213, %s211
      %s215 = smul.addr %s214, 8
      %s216 = scalar_lea.vmem %s2, %s215
      %s217 = smul.u32 32, %s18
      %p219 = scmp.eq.s32.totalorder %s20, 0
      // Predicated region
      $region29: #{conv2d_forward.1} parent=27 // pred_check
        %p220 = pneg %p219
      $region30: #{conv2d_forward.1} parent=27 // pred_check_branch
        %222 = sbr.rel (%p220) target = $region32
      $region31: #{conv2d_forward.1} parent=27 // pred_region
        %223 = vst [vmem:[%s216] sm:$0xff] 0.0
        %224 = vst [vmem:[%s216 + $0x8] sm:$0xff] 0.0
        %225 = vst [vmem:[%s216 + $0x10] sm:$0xff] 0.0
        %226 = vst [vmem:[%s216 + $0x18] sm:$0xff] 0.0
        %227 = vst [vmem:[%s216 + $0x20] sm:$0xff] 0.0
        %228 = vst [vmem:[%s216 + $0x28] sm:$0xff] 0.0
        %229 = vst [vmem:[%s216 + $0x30] sm:$0xff] 0.0
        %230 = vst [vmem:[%s216 + $0x38] sm:$0xff] 0.0
        %231 = vst [vmem:[%s216 + $0x40] sm:$0xff] 0.0
        %232 = vst [vmem:[%s216 + $0x48] sm:$0xff] 0.0
        %233 = vst [vmem:[%s216 + $0x50] sm:$0xff] 0.0
        %234 = vst [vmem:[%s216 + $0x58] sm:$0xff] 0.0
        %235 = vst [vmem:[%s216 + $0x60] sm:$0xff] 0.0
        %236 = vst [vmem:[%s216 + $0x68] sm:$0xff] 0.0
        %237 = vst [vmem:[%s216 + $0x70] sm:$0xff] 0.0
        %238 = vst [vmem:[%s216 + $0x78] sm:$0xff] 0.0
        %239 = vst [vmem:[%s216 + $0x80] sm:$0xff] 0.0
        %240 = vst [vmem:[%s216 + $0x88] sm:$0xff] 0.0
        %241 = vst [vmem:[%s216 + $0x90] sm:$0xff] 0.0
        %242 = vst [vmem:[%s216 + $0x98] sm:$0xff] 0.0
        %243 = vst [vmem:[%s216 + $0xa0] sm:$0xff] 0.0
        %244 = vst [vmem:[%s216 + $0xa8] sm:$0xff] 0.0
        %245 = vst [vmem:[%s216 + $0xb0] sm:$0xff] 0.0
        %246 = vst [vmem:[%s216 + $0xb8] sm:$0xff] 0.0
        %247 = vst [vmem:[%s216 + $0xc0] sm:$0xff] 0.0
        %248 = vst [vmem:[%s216 + $0xc8] sm:$0xff] 0.0
        %249 = vst [vmem:[%s216 + $0xd0] sm:$0xff] 0.0
        %250 = vst [vmem:[%s216 + $0xd8] sm:$0xff] 0.0
        %251 = vst [vmem:[%s216 + $0xe0] sm:$0xff] 0.0
        %252 = vst [vmem:[%s216 + $0xe8] sm:$0xff] 0.0
        %253 = vst [vmem:[%s216 + $0xf0] sm:$0xff] 0.0
        %254 = vst [vmem:[%s216 + $0xf8] sm:$0xff] 0.0
      $region32: #{conv2d_forward.1} parent=27 // pred_fallthru
        _
      %v255 = vld [vmem:[%s216] sm:$0xff]
      %v256 = vld [vmem:[%s216 + $0x8] sm:$0xff]
      %v257 = vld [vmem:[%s216 + $0x10] sm:$0xff]
      %v258 = vld [vmem:[%s216 + $0x18] sm:$0xff]
      %v259 = vld [vmem:[%s216 + $0x20] sm:$0xff]
      %v260 = vld [vmem:[%s216 + $0x28] sm:$0xff]
      %v261 = vld [vmem:[%s216 + $0x30] sm:$0xff]
      %v262 = vld [vmem:[%s216 + $0x38] sm:$0xff]
      %v263 = vld [vmem:[%s216 + $0x40] sm:$0xff]
      %v264 = vld [vmem:[%s216 + $0x48] sm:$0xff]
      %v265 = vld [vmem:[%s216 + $0x50] sm:$0xff]
      %v266 = vld [vmem:[%s216 + $0x58] sm:$0xff]
      %v267 = vld [vmem:[%s216 + $0x60] sm:$0xff]
      %v268 = vld [vmem:[%s216 + $0x68] sm:$0xff]
      %v269 = vld [vmem:[%s216 + $0x70] sm:$0xff]
      %v270 = vld [vmem:[%s216 + $0x78] sm:$0xff]
      %v271 = vld [vmem:[%s216 + $0x80] sm:$0xff]
      %v272 = vld [vmem:[%s216 + $0x88] sm:$0xff]
      %v273 = vld [vmem:[%s216 + $0x90] sm:$0xff]
      %v274 = vld [vmem:[%s216 + $0x98] sm:$0xff]
      %v275 = vld [vmem:[%s216 + $0xa0] sm:$0xff]
      %v276 = vld [vmem:[%s216 + $0xa8] sm:$0xff]
      %v277 = vld [vmem:[%s216 + $0xb0] sm:$0xff]
      %v278 = vld [vmem:[%s216 + $0xb8] sm:$0xff]
      %v279 = vld [vmem:[%s216 + $0xc0] sm:$0xff]
      %v280 = vld [vmem:[%s216 + $0xc8] sm:$0xff]
      %v281 = vld [vmem:[%s216 + $0xd0] sm:$0xff]
      %v282 = vld [vmem:[%s216 + $0xd8] sm:$0xff]
      %v283 = vld [vmem:[%s216 + $0xe0] sm:$0xff]
      %v284 = vld [vmem:[%s216 + $0xe8] sm:$0xff]
      %v285 = vld [vmem:[%s216 + $0xf0] sm:$0xff]
      %v286 = vld [vmem:[%s216 + $0xf8] sm:$0xff]
      %v287 = vld [vmem:[%s198] sm:$0xf]
      %v288 = vld [vmem:[%s198 + $0x4] sm:$0xf]
      %v289 = vld [vmem:[%s198 + $0x8] sm:$0xf]
      %v290 = vld [vmem:[%s198 + $0xc] sm:$0xf]
      %v291 = vld [vmem:[%s198 + $0x10] sm:$0xf]
      %v292 = vld [vmem:[%s198 + $0x14] sm:$0xf]
      %v293 = vld [vmem:[%s198 + $0x18] sm:$0xf]
      %v294 = vld [vmem:[%s198 + $0x1c] sm:$0xf]
      %v295 = vld [vmem:[%s198 + $0x20] sm:$0xf]
      %v296 = vld [vmem:[%s198 + $0x24] sm:$0xf]
      %v297 = vld [vmem:[%s198 + $0x28] sm:$0xf]
      %v298 = vld [vmem:[%s198 + $0x2c] sm:$0xf]
      %v299 = vld [vmem:[%s198 + $0x30] sm:$0xf]
      %v300 = vld [vmem:[%s198 + $0x34] sm:$0xf]
      %v301 = vld [vmem:[%s198 + $0x38] sm:$0xf]
      %v302 = vld [vmem:[%s198 + $0x3c] sm:$0xf]
      %v303 = vld [vmem:[%s198 + $0x40] sm:$0xf]
      %v304 = vld [vmem:[%s198 + $0x44] sm:$0xf]
      %v305 = vld [vmem:[%s198 + $0x48] sm:$0xf]
      %v306 = vld [vmem:[%s198 + $0x4c] sm:$0xf]
      %v307 = vld [vmem:[%s198 + $0x50] sm:$0xf]
      %v308 = vld [vmem:[%s198 + $0x54] sm:$0xf]
      %v309 = vld [vmem:[%s198 + $0x58] sm:$0xf]
      %v310 = vld [vmem:[%s198 + $0x5c] sm:$0xf]
      %v311 = vld [vmem:[%s198 + $0x60] sm:$0xf]
      %v312 = vld [vmem:[%s198 + $0x64] sm:$0xf]
      %v313 = vld [vmem:[%s198 + $0x68] sm:$0xf]
      %v314 = vld [vmem:[%s198 + $0x6c] sm:$0xf]
      %v315 = vld [vmem:[%s198 + $0x70] sm:$0xf]
      %v316 = vld [vmem:[%s198 + $0x74] sm:$0xf]
      %v317 = vld [vmem:[%s198 + $0x78] sm:$0xf]
      %v318 = vld [vmem:[%s198 + $0x7c] sm:$0xf]
      %v319 = vld [vmem:[%s207] sm:$0xf]
      %v320 = vld [vmem:[%s207 + $0x4] sm:$0xf]
      %v321 = vld [vmem:[%s207 + $0x8] sm:$0xf]
      %v322 = vld [vmem:[%s207 + $0xc] sm:$0xf]
      %v323 = vld [vmem:[%s207 + $0x10] sm:$0xf]
      %v324 = vld [vmem:[%s207 + $0x14] sm:$0xf]
      %v325 = vld [vmem:[%s207 + $0x18] sm:$0xf]
      %v326 = vld [vmem:[%s207 + $0x1c] sm:$0xf]
      %v327 = vld [vmem:[%s207 + $0x20] sm:$0xf]
      %v328 = vld [vmem:[%s207 + $0x24] sm:$0xf]
      %v329 = vld [vmem:[%s207 + $0x28] sm:$0xf]
      %v330 = vld [vmem:[%s207 + $0x2c] sm:$0xf]
      %v331 = vld [vmem:[%s207 + $0x30] sm:$0xf]
      %v332 = vld [vmem:[%s207 + $0x34] sm:$0xf]
      %v333 = vld [vmem:[%s207 + $0x38] sm:$0xf]
      %v334 = vld [vmem:[%s207 + $0x3c] sm:$0xf]
      %v367 = vunpack.c.l.b16 %v287
      %v368 = vunpack.c.l.b16 %v288
      %v369 = vunpack.c.l.b16 %v289
      %v370 = vunpack.c.l.b16 %v290
      %v371 = vunpack.c.l.b16 %v291
      %v372 = vunpack.c.l.b16 %v292
      %v373 = vunpack.c.l.b16 %v293
      %v374 = vunpack.c.l.b16 %v294
      %v375 = vunpack.c.l.b16 %v295
      %v376 = vunpack.c.l.b16 %v296
      %v377 = vunpack.c.l.b16 %v297
      %v378 = vunpack.c.l.b16 %v298
      %v379 = vunpack.c.l.b16 %v299
      %v380 = vunpack.c.l.b16 %v300
      %v381 = vunpack.c.l.b16 %v301
      %v382 = vunpack.c.l.b16 %v302
      %v383 = vunpack.c.l.b16 %v303
      %v384 = vunpack.c.l.b16 %v304
      %v385 = vunpack.c.l.b16 %v305
      %v386 = vunpack.c.l.b16 %v306
      %v387 = vunpack.c.l.b16 %v307
      %v388 = vunpack.c.l.b16 %v308
      %v389 = vunpack.c.l.b16 %v309
      %v390 = vunpack.c.l.b16 %v310
      %v391 = vunpack.c.l.b16 %v311
      %v392 = vunpack.c.l.b16 %v312
      %v393 = vunpack.c.l.b16 %v313
      %v394 = vunpack.c.l.b16 %v314
      %v395 = vunpack.c.l.b16 %v315
      %v396 = vunpack.c.l.b16 %v316
      %v397 = vunpack.c.l.b16 %v317
      %v398 = vunpack.c.l.b16 %v318
      %v399 = vpack.c.b16 %v368, %v367
      %v400 = vpack.c.b16 %v370, %v369
      %v401 = vpack.c.b16 %v372, %v371
      %v402 = vpack.c.b16 %v374, %v373
      %v403 = vpack.c.b16 %v376, %v375
      %v404 = vpack.c.b16 %v378, %v377
      %v405 = vpack.c.b16 %v380, %v379
      %v406 = vpack.c.b16 %v382, %v381
      %v407 = vpack.c.b16 %v384, %v383
      %v408 = vpack.c.b16 %v386, %v385
      %v409 = vpack.c.b16 %v388, %v387
      %v410 = vpack.c.b16 %v390, %v389
      %v411 = vpack.c.b16 %v392, %v391
      %v412 = vpack.c.b16 %v394, %v393
      %v413 = vpack.c.b16 %v396, %v395
      %v414 = vpack.c.b16 %v398, %v397
      %v447 = vunpack.c.l.b16 %v319
      %v448 = vunpack.c.l.b16 %v320
      %v449 = vunpack.c.l.b16 %v321
      %v450 = vunpack.c.l.b16 %v322
      %v451 = vunpack.c.l.b16 %v323
      %v452 = vunpack.c.l.b16 %v324
      %v453 = vunpack.c.l.b16 %v325
      %v454 = vunpack.c.l.b16 %v326
      %v455 = vunpack.c.l.b16 %v327
      %v456 = vunpack.c.l.b16 %v328
      %v457 = vunpack.c.l.b16 %v329
      %v458 = vunpack.c.l.b16 %v330
      %v459 = vunpack.c.l.b16 %v331
      %v460 = vunpack.c.l.b16 %v332
      %v461 = vunpack.c.l.b16 %v333
      %v462 = vunpack.c.l.b16 %v334
      %v463 = vpack.c.b16 %v448, %v447
      %v464 = vpack.c.b16 %v450, %v449
      %v465 = vpack.c.b16 %v452, %v451
      %v466 = vpack.c.b16 %v454, %v453
      %v467 = vpack.c.b16 %v456, %v455
      %v468 = vpack.c.b16 %v458, %v457
      %v469 = vpack.c.b16 %v460, %v459
      %v470 = vpack.c.b16 %v462, %v461
      %479 = vmatprep.subr.bf16.mxu0 0
      %480 = vmatpush1.bf16.msra.mxu0 %v470
      %481 = vmatprep.subr.bf16.mxu0 0
      %482 = vmatpush1.bf16.msra.mxu0 %v469
      %483 = vmatprep.subr.bf16.mxu0 0
      %484 = vmatpush1.bf16.msra.mxu0 %v468
      %485 = vmatprep.subr.bf16.mxu0 0
      %486 = vmatpush1.bf16.msra.mxu0 %v467
      %487 = vmatprep.subr.bf16.mxu0 0
      %488 = vmatpush1.bf16.msra.mxu0 %v466
      %489 = vmatprep.subr.bf16.mxu0 0
      %490 = vmatpush1.bf16.msra.mxu0 %v465
      %491 = vmatprep.subr.bf16.mxu0 0
      %492 = vmatpush1.bf16.msra.mxu0 %v464
      %493 = vmatprep.subr.bf16.mxu0 0
      %494 = vmatpush1.bf16.msra.mxu0 %v463
      %495 = vmatprep.subr.bf16.mxu0 0
      %496 = vmatpush2.bf16.msra.mxu0 0
      %497 = vmatprep.subr.bf16.mxu0 0
      %498 = vmatpush2.bf16.msra.mxu0 0
      %499 = vmatprep.subr.bf16.mxu0 0
      %500 = vmatpush2.bf16.msra.mxu0 0
      %501 = vmatprep.subr.bf16.mxu0 0
      %502 = vmatpush2.bf16.msra.mxu0 0
      %503 = vmatprep.subr.bf16.mxu0 0
      %504 = vmatpush2.bf16.msra.mxu0 0
      %505 = vmatprep.subr.bf16.mxu0 0
      %506 = vmatpush2.bf16.msra.mxu0 0
      %507 = vmatprep.subr.bf16.mxu0 0
      %508 = vmatpush2.bf16.msra.mxu0 0
      %509 = vmatprep.subr.bf16.mxu0 0
      %510 = vmatpush2.bf16.msra.mxu0 0
      %511 = vmatprep.mubr.bf16.mxu0 0
      %512 = vmatmul.mubr.bf16.gmra.mxu0 %v399
      %v513 = vpop.f32.mrf.mxu0
      %v514 = vadd.f32 0.0, %v513
      %v515 = vpop.f32.mrf.mxu0
      %v516 = vpop.f32.mrf.mxu0
      %v517 = vadd.f32 0.0, %v516
      %v518 = vpop.f32.mrf.mxu0
      %519 = vmatprep.mubr.bf16.mxu0 0
      %520 = vmatmul.mubr.bf16.gmra.mxu0 %v400
      %v521 = vpop.f32.mrf.mxu0
      %v522 = vadd.f32 0.0, %v521
      %v523 = vpop.f32.mrf.mxu0
      %v524 = vpop.f32.mrf.mxu0
      %v525 = vadd.f32 0.0, %v524
      %v526 = vpop.f32.mrf.mxu0
      %527 = vmatprep.mubr.bf16.mxu0 0
      %528 = vmatmul.mubr.bf16.gmra.mxu0 %v401
      %v529 = vpop.f32.mrf.mxu0
      %v530 = vadd.f32 0.0, %v529
      %v531 = vpop.f32.mrf.mxu0
      %v532 = vpop.f32.mrf.mxu0
      %v533 = vadd.f32 0.0, %v532
      %v534 = vpop.f32.mrf.mxu0
      %535 = vmatprep.mubr.bf16.mxu0 0
      %536 = vmatmul.mubr.bf16.gmra.mxu0 %v402
      %v537 = vpop.f32.mrf.mxu0
      %v538 = vadd.f32 0.0, %v537
      %v539 = vpop.f32.mrf.mxu0
      %v540 = vpop.f32.mrf.mxu0
      %v541 = vadd.f32 0.0, %v540
      %v542 = vpop.f32.mrf.mxu0
      %543 = vmatprep.mubr.bf16.mxu0 0
      %544 = vmatmul.mubr.bf16.gmra.mxu0 %v403
      %v545 = vpop.f32.mrf.mxu0
      %v546 = vadd.f32 0.0, %v545
      %v547 = vpop.f32.mrf.mxu0
      %v548 = vpop.f32.mrf.mxu0
      %v549 = vadd.f32 0.0, %v548
      %v550 = vpop.f32.mrf.mxu0
      %551 = vmatprep.mubr.bf16.mxu0 0
      %552 = vmatmul.mubr.bf16.gmra.mxu0 %v404
      %v553 = vpop.f32.mrf.mxu0
      %v554 = vadd.f32 0.0, %v553
      %v555 = vpop.f32.mrf.mxu0
      %v556 = vpop.f32.mrf.mxu0
      %v557 = vadd.f32 0.0, %v556
      %v558 = vpop.f32.mrf.mxu0
      %559 = vmatprep.mubr.bf16.mxu0 0
      %560 = vmatmul.mubr.bf16.gmra.mxu0 %v405
      %v561 = vpop.f32.mrf.mxu0
      %v562 = vadd.f32 0.0, %v561
      %v563 = vpop.f32.mrf.mxu0
      %v564 = vpop.f32.mrf.mxu0
      %v565 = vadd.f32 0.0, %v564
      %v566 = vpop.f32.mrf.mxu0
      %567 = vmatprep.mubr.bf16.mxu0 0
      %568 = vmatmul.mubr.bf16.gmra.mxu0 %v406
      %v569 = vpop.f32.mrf.mxu0
      %v570 = vadd.f32 0.0, %v569
      %v571 = vpop.f32.mrf.mxu0
      %v572 = vpop.f32.mrf.mxu0
      %v573 = vadd.f32 0.0, %v572
      %v574 = vpop.f32.mrf.mxu0
      %575 = vmatprep.mubr.bf16.mxu0 0
      %576 = vmatmul.mubr.bf16.gmra.mxu0 %v407
      %v577 = vpop.f32.mrf.mxu0
      %v578 = vadd.f32 0.0, %v577
      %v579 = vpop.f32.mrf.mxu0
      %v580 = vpop.f32.mrf.mxu0
      %v581 = vadd.f32 0.0, %v580
      %v582 = vpop.f32.mrf.mxu0
      %583 = vmatprep.mubr.bf16.mxu0 0
      %584 = vmatmul.mubr.bf16.gmra.mxu0 %v408
      %v585 = vpop.f32.mrf.mxu0
      %v586 = vadd.f32 0.0, %v585
      %v587 = vpop.f32.mrf.mxu0
      %v588 = vpop.f32.mrf.mxu0
      %v589 = vadd.f32 0.0, %v588
      %v590 = vpop.f32.mrf.mxu0
      %591 = vmatprep.mubr.bf16.mxu0 0
      %592 = vmatmul.mubr.bf16.gmra.mxu0 %v409
      %v593 = vpop.f32.mrf.mxu0
      %v594 = vadd.f32 0.0, %v593
      %v595 = vpop.f32.mrf.mxu0
      %v596 = vpop.f32.mrf.mxu0
      %v597 = vadd.f32 0.0, %v596
      %v598 = vpop.f32.mrf.mxu0
      %599 = vmatprep.mubr.bf16.mxu0 0
      %600 = vmatmul.mubr.bf16.gmra.mxu0 %v410
      %v601 = vpop.f32.mrf.mxu0
      %v602 = vadd.f32 0.0, %v601
      %v603 = vpop.f32.mrf.mxu0
      %v604 = vpop.f32.mrf.mxu0
      %v605 = vadd.f32 0.0, %v604
      %v606 = vpop.f32.mrf.mxu0
      %607 = vmatprep.mubr.bf16.mxu0 0
      %608 = vmatmul.mubr.bf16.gmra.mxu0 %v411
      %v609 = vpop.f32.mrf.mxu0
      %v610 = vadd.f32 0.0, %v609
      %v611 = vpop.f32.mrf.mxu0
      %v612 = vpop.f32.mrf.mxu0
      %v613 = vadd.f32 0.0, %v612
      %v614 = vpop.f32.mrf.mxu0
      %615 = vmatprep.mubr.bf16.mxu0 0
      %616 = vmatmul.mubr.bf16.gmra.mxu0 %v412
      %v617 = vpop.f32.mrf.mxu0
      %v618 = vadd.f32 0.0, %v617
      %v619 = vpop.f32.mrf.mxu0
      %v620 = vpop.f32.mrf.mxu0
      %v621 = vadd.f32 0.0, %v620
      %v622 = vpop.f32.mrf.mxu0
      %623 = vmatprep.mubr.bf16.mxu0 0
      %624 = vmatmul.mubr.bf16.gmra.mxu0 %v413
      %v625 = vpop.f32.mrf.mxu0
      %v626 = vadd.f32 0.0, %v625
      %v627 = vpop.f32.mrf.mxu0
      %v628 = vpop.f32.mrf.mxu0
      %v629 = vadd.f32 0.0, %v628
      %v630 = vpop.f32.mrf.mxu0
      %631 = vmatprep.mubr.bf16.mxu0 0
      %632 = vmatmul.mubr.bf16.gmra.mxu0 %v414
      %v633 = vpop.f32.mrf.mxu0
      %v634 = vadd.f32 0.0, %v633
      %v635 = vpop.f32.mrf.mxu0
      %v636 = vpop.f32.mrf.mxu0
      %v637 = vadd.f32 0.0, %v636
      %v638 = vpop.f32.mrf.mxu0
      %639 = vdwg.mxu0
      %v640 = vadd.f32 %v255, %v514
      %v641 = vadd.f32 %v256, %v517
      %v642 = vadd.f32 %v257, %v522
      %v643 = vadd.f32 %v258, %v525
      %v644 = vadd.f32 %v259, %v530
      %v645 = vadd.f32 %v260, %v533
      %v646 = vadd.f32 %v261, %v538
      %v647 = vadd.f32 %v262, %v541
      %v648 = vadd.f32 %v263, %v546
      %v649 = vadd.f32 %v264, %v549
      %v650 = vadd.f32 %v265, %v554
      %v651 = vadd.f32 %v266, %v557
      %v652 = vadd.f32 %v267, %v562
      %v653 = vadd.f32 %v268, %v565
      %v654 = vadd.f32 %v269, %v570
      %v655 = vadd.f32 %v270, %v573
      %v656 = vadd.f32 %v271, %v578
      %v657 = vadd.f32 %v272, %v581
      %v658 = vadd.f32 %v273, %v586
      %v659 = vadd.f32 %v274, %v589
      %v660 = vadd.f32 %v275, %v594
      %v661 = vadd.f32 %v276, %v597
      %v662 = vadd.f32 %v277, %v602
      %v663 = vadd.f32 %v278, %v605
      %v664 = vadd.f32 %v279, %v610
      %v665 = vadd.f32 %v280, %v613
      %v666 = vadd.f32 %v281, %v618
      %v667 = vadd.f32 %v282, %v621
      %v668 = vadd.f32 %v283, %v626
      %v669 = vadd.f32 %v284, %v629
      %v670 = vadd.f32 %v285, %v634
      %v671 = vadd.f32 %v286, %v637
      %672 = vst [vmem:[%s216] sm:$0xff] %v640
      %673 = vst [vmem:[%s216 + $0x8] sm:$0xff] %v641
      %674 = vst [vmem:[%s216 + $0x10] sm:$0xff] %v642
      %675 = vst [vmem:[%s216 + $0x18] sm:$0xff] %v643
      %676 = vst [vmem:[%s216 + $0x20] sm:$0xff] %v644
      %677 = vst [vmem:[%s216 + $0x28] sm:$0xff] %v645
      %678 = vst [vmem:[%s216 + $0x30] sm:$0xff] %v646
      %679 = vst [vmem:[%s216 + $0x38] sm:$0xff] %v647
      %680 = vst [vmem:[%s216 + $0x40] sm:$0xff] %v648
      %681 = vst [vmem:[%s216 + $0x48] sm:$0xff] %v649
      %682 = vst [vmem:[%s216 + $0x50] sm:$0xff] %v650
      %683 = vst [vmem:[%s216 + $0x58] sm:$0xff] %v651
      %684 = vst [vmem:[%s216 + $0x60] sm:$0xff] %v652
      %685 = vst [vmem:[%s216 + $0x68] sm:$0xff] %v653
      %686 = vst [vmem:[%s216 + $0x70] sm:$0xff] %v654
      %687 = vst [vmem:[%s216 + $0x78] sm:$0xff] %v655
      %688 = vst [vmem:[%s216 + $0x80] sm:$0xff] %v656
      %689 = vst [vmem:[%s216 + $0x88] sm:$0xff] %v657
      %690 = vst [vmem:[%s216 + $0x90] sm:$0xff] %v658
      %691 = vst [vmem:[%s216 + $0x98] sm:$0xff] %v659
      %692 = vst [vmem:[%s216 + $0xa0] sm:$0xff] %v660
      %693 = vst [vmem:[%s216 + $0xa8] sm:$0xff] %v661
      %694 = vst [vmem:[%s216 + $0xb0] sm:$0xff] %v662
      %695 = vst [vmem:[%s216 + $0xb8] sm:$0xff] %v663
      %696 = vst [vmem:[%s216 + $0xc0] sm:$0xff] %v664
      %697 = vst [vmem:[%s216 + $0xc8] sm:$0xff] %v665
      %698 = vst [vmem:[%s216 + $0xd0] sm:$0xff] %v666
      %699 = vst [vmem:[%s216 + $0xd8] sm:$0xff] %v667
      %700 = vst [vmem:[%s216 + $0xe0] sm:$0xff] %v668
      %701 = vst [vmem:[%s216 + $0xe8] sm:$0xff] %v669
      %702 = vst [vmem:[%s216 + $0xf0] sm:$0xff] %v670
      %703 = vst [vmem:[%s216 + $0xf8] sm:$0xff] %v671
      %s704 = smul.u32 32, %s18
      %p705 = scmp.lt.s32.totalorder %s704, 63
      %s706 = scalar_select %p705, %s704, 63
      %p707 = scmp.lt.s32.totalorder %s19, 0
      %s708 = scalar_select %p707, %s19, 0
      %s709 = sadd.s32 %s708, %s706
      %s710 = smul.addr %s709, 8
      %s711 = scalar_lea.vmem %s2, %s710
      // Predicated region
      $region33: #{conv2d_forward.1} parent=27 // pred_check
        %p712 = pneg %p108
      $region34: #{conv2d_forward.1} parent=27 // pred_check_branch
        %714 = sbr.rel (%p712) target = $region36
      $region35: #{conv2d_forward.1} parent=27 // pred_region
        %s715 = smul.u32 32, %s18
      $region36: #{conv2d_forward.1} parent=27 // pred_fallthru
        _
    $region28: #{conv2d_forward.1} parent=5 // pred_fallthru
      _
    %p716 = scmp.le.s32.totalorder 2, %s8
    // Predicated region
    $region37: #{conv2d_forward.1} parent=5 // pred_check
      %p717 = pneg %p716
    $region38: #{conv2d_forward.1} parent=5 // pred_check_branch
      %719 = sbr.rel (%p717) target = $region40
    $region39: #{conv2d_forward.1} parent=5 // pred_region
      %s720 = ssub.s32 %s8, 2
      // Predicated region
      $region41: #{conv2d_forward.1} parent=39 // pred_check
        %p721 = pneg %p114
      $region42: #{conv2d_forward.1} parent=39 // pred_check_branch
        %723 = sbr.rel (%p721) target = $region44
      $region43: #{conv2d_forward.1} parent=39 // pred_region
        %s724 = smul.u32 32, %s21
        %p725 = scmp.lt.s32.totalorder %s724, 63
        %s726 = scalar_select %p725, %s724, 63
        %p727 = scmp.lt.s32.totalorder %s22, 0
        %s728 = scalar_select %p727, %s22, 0
        %s729 = sadd.s32 %s728, %s726
        %s730 = smul.addr %s729, 8
        %s731 = scalar_lea.vmem %s2, %s730
      $region44: #{conv2d_forward.1} parent=39 // pred_fallthru
        _
    $region40: #{conv2d_forward.1} parent=5 // pred_fallthru
      _
  $region6: #{conv2d_forward.1} parent=0 // loop_footer
    %s12 = sadd.s32 1, %s8
  $region7: #{conv2d_forward.1} parent=0 // loop_footer_branch
    %7 = sbr.rel target = $region3
  $region8: #{conv2d_forward.1} parent=0 // loop_exit
    _

</llo_original>
